<compile_context>
chip_gen: v7x
topology: tpu7x:2x2x1
jax: 0.10.0
libtpu: 0.0.40
codegen_flags: <defaults>
</compile_context>

<pallas_src>
import functools

import jax
import jax.numpy as jnp
from jax.experimental import pallas as pl
from jax.experimental.pallas import tpu as pltpu

_EPS = 1e-6  # TODO(synk): incasem's GeneralizedDiceLoss epsilon/clamping details are
             # not in the snippet; standard Sudre et al. (2017) GDL smoothing is used.


def _round_up(x, m):
    return ((x + m - 1) // m) * m


def _ce_dice_kernel(x_ref, t_ref, w_ref, out_ref,
                    acc_nll, acc_r, acc_i, acc_p,
                    *, hw, tile_p, needs_mask):
    """One grid step processes a (C, tile_p) slab of one batch element."""
    n_i = pl.program_id(0)
    p_j = pl.program_id(1)

    @pl.when(jnp.logical_and(n_i == 0, p_j == 0))
    def _init():
        acc_nll[...] = jnp.zeros_like(acc_nll)
        acc_r[...] = jnp.zeros_like(acc_r)
        acc_i[...] = jnp.zeros_like(acc_i)
        acc_p[...] = jnp.zeros_like(acc_p)

    x = x_ref[...].astype(jnp.float32)     # (C, Tp) logits (upcast in-kernel)
    t = t_ref[...].astype(jnp.int32)       # (1, Tp) targets

    if needs_mask:
        lane = jax.lax.broadcasted_iota(jnp.int32, (1, tile_p), 1) + p_j * tile_p
        valid = lane < hw                   # (1, Tp) bool; False on tail padding
        validf = valid.astype(jnp.float32)
        x = jnp.where(valid, x, 0.0)        # neutralize garbage in OOB lanes

    # softmax / log-sum-exp over the class (sublane) axis
    m = jnp.max(x, axis=0, keepdims=True)            # (1, Tp)
    e = jnp.exp(x - m)                                # (C, Tp)   EUP
    s = jnp.sum(e, axis=0, keepdims=True)             # (1, Tp)
    r0 = pl.reciprocal(s, approx=True)                # EUP approx 1/s
    rinv = r0 * (2.0 - s * r0)                        # one Newton step -> ~f32 exact
    probs = e * rinv                                  # (C, Tp)
    lse = m + jnp.log(s)                              # (1, Tp) logsumexp

    cls = jax.lax.broadcasted_iota(jnp.int32, x.shape, 0)
    onehot = cls == t                                 # (C, Tp) bool
    if needs_mask:
        onehot = jnp.logical_and(onehot, valid)
    onehot = onehot.astype(jnp.float32)

    # Per-tile lane reductions (XLU) into tiny per-class accumulators.
    # TODO(synk): for extremely large volumes (P >~ 1e8 voxels) consider wider
    # per-class partials to limit f32 accumulation error.
    acc_nll[...] += jnp.sum(onehot * (lse - x), axis=1, keepdims=True)   # (C, 1)
    acc_r[...] += jnp.sum(onehot, axis=1, keepdims=True)                 # (C, 1)
    acc_i[...] += jnp.sum(probs * onehot, axis=1, keepdims=True)         # (C, 1)
    if needs_mask:
        acc_p[...] += jnp.sum(probs * validf, axis=1, keepdims=True)     # (C, 1)
    else:
        acc_p[...] += jnp.sum(probs, axis=1, keepdims=True)              # (C, 1)

    @pl.when(jnp.logical_and(n_i == pl.num_programs(0) - 1,
                             p_j == pl.num_programs(1) - 1))
    def _finalize():
        w = w_ref[...].astype(jnp.float32)            # (C, 1) class weights
        nll = acc_nll[...]
        r = acc_r[...]
        inter = acc_i[...]
        psum = acc_p[...]

        # Weighted-mean cross entropy:  Σ_v w[t_v]·nll_v / Σ_v w[t_v]
        ce_num = jnp.sum(w * nll, keepdims=True)                          # (1, 1)
        ce_den = jnp.sum(w * r, keepdims=True)                            # (1, 1)
        ce = ce_num / ce_den

        # Generalized Dice loss (Sudre et al. 2017)
        wcls = 1.0 / jnp.maximum(r * r, _EPS)                             # (C, 1)
        num = 2.0 * jnp.sum(wcls * inter, keepdims=True)                  # (1, 1)
        den = jnp.maximum(jnp.sum(wcls * (r + psum), keepdims=True), _EPS)
        dice = 1.0 - num / den

        out_ref[...] = ce + dice


def cross_entropy_and_dice_loss(logits_nchw, target_nhw, weight=None, *, tile_p=8192):
    """CrossEntropyLoss(mean) + GeneralizedDiceLoss in a single Pallas kernel."""
    N, C, H, W = logits_nchw.shape
    hw = H * W

    # Free reshapes only: no HBM transpose, no dtype cast of the logits.
    x = logits_nchw.reshape(N, C, hw)                     # native dtype
    t = target_nhw.reshape(N, 1, hw).astype(jnp.int32)
    if weight is None:
        wv = jnp.ones((C, 1), jnp.float32)
    else:
        wv = jnp.asarray(weight, jnp.float32).reshape(C, 1)

    # Lane tile: multiple of 128, no larger than the (128-rounded) spatial extent.
    tile_p = max(128, _round_up(min(tile_p, _round_up(hw, 128)), 128))
    grid_p = pl.cdiv(hw, tile_p)
    needs_mask = (grid_p * tile_p != hw)

    kernel = functools.partial(_ce_dice_kernel, hw=hw, tile_p=tile_p,
                               needs_mask=needs_mask)

    out = pl.pallas_call(
        kernel,
        out_shape=jax.ShapeDtypeStruct((1, 1), jnp.float32),
        grid_spec=pltpu.PrefetchScalarGridSpec(
            num_scalar_prefetch=0,
            grid=(N, grid_p),
            in_specs=[
                # logits slab: (C, tile_p) of batch element i
                pl.BlockSpec((pl.Squeezed(), C, tile_p), lambda i, j: (i, 0, j)),
                # targets slab: (1, tile_p) of batch element i
                pl.BlockSpec((pl.Squeezed(), 1, tile_p), lambda i, j: (i, 0, j)),
                # class weights (only read in finalize; constant block => single DMA)
                pl.BlockSpec((C, 1), lambda i, j: (0, 0)),
            ],
            out_specs=pl.BlockSpec((1, 1), lambda i, j: (0, 0)),
            scratch_shapes=[pltpu.VMEM((C, 1), jnp.float32)] * 4,
        ),
        compiler_params=pltpu.CompilerParams(
            # Accumulators carry across both grid axes -> sequential.
            dimension_semantics=("arbitrary", "arbitrary")),
    )(x, t, wv)
    return out[0, 0]


def _reference_loss(logits, target, weight=None):
    """Pure-JAX reference mirroring torch CrossEntropyLoss + Generalized Dice."""
    N, C, H, W = logits.shape
    logp = jax.nn.log_softmax(logits.astype(jnp.float32), axis=1)
    probs = jnp.exp(logp)
    onehot = jax.nn.one_hot(target, C, axis=1, dtype=jnp.float32)   # (N,C,H,W)
    wv = jnp.ones((C,), jnp.float32) if weight is None else jnp.asarray(weight, jnp.float32)

    wmap = wv[target]                                               # (N,H,W)
    nll = -jnp.take_along_axis(logp, target[:, None], axis=1)[:, 0]
    ce = jnp.sum(wmap * nll) / jnp.sum(wmap)

    r = jnp.sum(onehot, axis=(0, 2, 3))
    p = jnp.sum(probs, axis=(0, 2, 3))
    inter = jnp.sum(probs * onehot, axis=(0, 2, 3))
    wcls = 1.0 / jnp.maximum(r * r, _EPS)
    num = 2.0 * jnp.sum(wcls * inter)
    den = jnp.maximum(jnp.sum(wcls * (r + p)), _EPS)
    dice = 1.0 - num / den
    return ce + dice


if __name__ == "__main__":
    key = jax.random.PRNGKey(0)
    k_x, k_t, k_x2, k_t2 = jax.random.split(key, 4)

    # Case 1: batch=2, classes=4, spatial 16x16, no class weights (mask-free path).
    N, C, H, W = 2, 4, 16, 16
    logits = jax.random.normal(k_x, (N, C, H, W), dtype=jnp.float32)
    target = jax.random.randint(k_t, (N, H, W), 0, C, dtype=jnp.int32)
    loss = jax.block_until_ready(cross_entropy_and_dice_loss(logits, target))
    ref = _reference_loss(logits, target)
    assert jnp.isfinite(loss), "kernel produced non-finite loss"
    assert jnp.allclose(loss, ref, rtol=1e-4, atol=1e-4), (loss, ref)

    # Case 2: non-128-multiple spatial extent + class weights (tail-mask path).
    N2, C2, H2, W2 = 2, 4, 15, 11
    logits2 = jax.random.normal(k_x2, (N2, C2, H2, W2), dtype=jnp.float32)
    target2 = jax.random.randint(k_t2, (N2, H2, W2), 0, C2, dtype=jnp.int32)
    wgt = jnp.array([1.0, 2.0, 0.5, 1.5], jnp.float32)
    loss2 = jax.block_until_ready(
        cross_entropy_and_dice_loss(logits2, target2, weight=wgt))
    ref2 = _reference_loss(logits2, target2, weight=wgt)
    assert jnp.isfinite(loss2), "kernel produced non-finite loss (masked case)"
    assert jnp.allclose(loss2, ref2, rtol=1e-4, atol=1e-4), (loss2, ref2)

    print("KERNEL_OK")
</pallas_src>

<mosaic_0001>
module attributes {stable_mosaic.version = 11 : i64} {
  func.func @_ce_dice_kernel(%arg0: i32, %arg1: i32, %arg2: memref<1x4x256xf32, #tpu.memory_space<vmem>>, %arg3: memref<1x1x256xi32, #tpu.memory_space<vmem>>, %arg4: memref<4x1xf32, #tpu.memory_space<vmem>>, %arg5: memref<1x1xf32, #tpu.memory_space<vmem>>, %arg6: memref<4x1xf32, #tpu.memory_space<vmem>>, %arg7: memref<4x1xf32, #tpu.memory_space<vmem>>, %arg8: memref<4x1xf32, #tpu.memory_space<vmem>>, %arg9: memref<4x1xf32, #tpu.memory_space<vmem>>) attributes {dimension_semantics = [#tpu.dimension_semantics<arbitrary>, #tpu.dimension_semantics<arbitrary>], iteration_bounds = array<i64: 2, 1>, scalar_prefetch = 0 : i64, scratch_operands = 4 : i64, tpu.core_type = #tpu.core_type<tc>, window_params = [{transform_indices = @transform_0, window_bounds = array<i64: 1, 4, 256>}, {transform_indices = @transform_1, window_bounds = array<i64: 1, 1, 256>}, {pipeline_mode = #tpu.pipeline_mode<synchronous>, transform_indices = @transform_2, window_bounds = array<i64: 4, 1>}, {pipeline_mode = #tpu.pipeline_mode<synchronous>, transform_indices = @transform_3, window_bounds = array<i64: 1, 1>}]} {
    %c0_i32 = arith.constant 0 : i32
    %0 = arith.cmpi eq, %arg0, %c0_i32 : i32
    %c0_i32_0 = arith.constant 0 : i32
    %1 = arith.cmpi eq, %arg1, %c0_i32_0 : i32
    %2 = arith.andi %0, %1 : i1
    %3 = arith.extui %2 : i1 to i32
    %c0_i32_1 = arith.constant 0 : i32
    %4 = arith.cmpi ne, %3, %c0_i32_1 : i32
    scf.if %4 {
      %cst_31 = arith.constant 0.000000e+00 : f32
      %59 = vector.broadcast %cst_31 : f32 to vector<4x1xf32>
      %c0_32 = arith.constant 0 : index
      %c0_33 = arith.constant 0 : index
      %60 = vector.load %arg6[%c0_32, %c0_33] : memref<4x1xf32, #tpu.memory_space<vmem>>, vector<4x1xf32>
      tpu.vector_store %arg6[%c0_32, %c0_33], %59 {strides = array<i32>} : memref<4x1xf32, #tpu.memory_space<vmem>>, vector<4x1xf32>,
      %cst_34 = arith.constant 0.000000e+00 : f32
      %61 = vector.broadcast %cst_34 : f32 to vector<4x1xf32>
      %c0_35 = arith.constant 0 : index
      %c0_36 = arith.constant 0 : index
      %62 = vector.load %arg7[%c0_35, %c0_36] : memref<4x1xf32, #tpu.memory_space<vmem>>, vector<4x1xf32>
      tpu.vector_store %arg7[%c0_35, %c0_36], %61 {strides = array<i32>} : memref<4x1xf32, #tpu.memory_space<vmem>>, vector<4x1xf32>,
      %cst_37 = arith.constant 0.000000e+00 : f32
      %63 = vector.broadcast %cst_37 : f32 to vector<4x1xf32>
      %c0_38 = arith.constant 0 : index
      %c0_39 = arith.constant 0 : index
      %64 = vector.load %arg8[%c0_38, %c0_39] : memref<4x1xf32, #tpu.memory_space<vmem>>, vector<4x1xf32>
      tpu.vector_store %arg8[%c0_38, %c0_39], %63 {strides = array<i32>} : memref<4x1xf32, #tpu.memory_space<vmem>>, vector<4x1xf32>,
      %cst_40 = arith.constant 0.000000e+00 : f32
      %65 = vector.broadcast %cst_40 : f32 to vector<4x1xf32>
      %c0_41 = arith.constant 0 : index
      %c0_42 = arith.constant 0 : index
      %66 = vector.load %arg9[%c0_41, %c0_42] : memref<4x1xf32, #tpu.memory_space<vmem>>, vector<4x1xf32>
      tpu.vector_store %arg9[%c0_41, %c0_42], %65 {strides = array<i32>} : memref<4x1xf32, #tpu.memory_space<vmem>>, vector<4x1xf32>,
    } else {
    }
    %c0 = arith.constant 0 : index
    %c0_2 = arith.constant 0 : index
    %c0_3 = arith.constant 0 : index
    %5 = vector.load %arg2[%c0, %c0_2, %c0_3] : memref<1x4x256xf32, #tpu.memory_space<vmem>>, vector<1x4x256xf32>
    %6 = vector.shape_cast %5 : vector<1x4x256xf32> to vector<4x256xf32>
    %c0_4 = arith.constant 0 : index
    %c0_5 = arith.constant 0 : index
    %c0_6 = arith.constant 0 : index
    %7 = vector.load %arg3[%c0_4, %c0_5, %c0_6] : memref<1x1x256xi32, #tpu.memory_space<vmem>>, vector<1x1x256xi32>
    %8 = vector.shape_cast %7 : vector<1x1x256xi32> to vector<1x256xi32>
    %cst = arith.constant dense<0xFF800000> : vector<256xf32>
    %9 = vector.multi_reduction <maximumf>, %6, %cst [0] : vector<4x256xf32> to vector<256xf32>
    %10 = vector.shape_cast %9 : vector<256xf32> to vector<1x256xf32>
    %11 = vector.broadcast %10 : vector<1x256xf32> to vector<4x256xf32>
    %12 = arith.subf %6, %11 : vector<4x256xf32>
    %13 = math.exp %12 : vector<4x256xf32>
    %cst_7 = arith.constant dense<0.000000e+00> : vector<256xf32>
    %14 = vector.multi_reduction <add>, %13, %cst_7 [0] : vector<4x256xf32> to vector<256xf32>
    %15 = vector.shape_cast %14 : vector<256xf32> to vector<1x256xf32>
    %16 = tpu.reciprocal %15 {approx = true} : vector<1x256xf32> -> vector<1x256xf32>
    %17 = arith.mulf %15, %16 : vector<1x256xf32>
    %cst_8 = arith.constant 2.000000e+00 : f32
    %18 = vector.broadcast %cst_8 : f32 to vector<1x256xf32>
    %19 = arith.subf %18, %17 : vector<1x256xf32>
    %20 = arith.mulf %16, %19 : vector<1x256xf32>
    %21 = vector.broadcast %20 : vector<1x256xf32> to vector<4x256xf32>
    %22 = arith.mulf %13, %21 : vector<4x256xf32>
    %23 = math.log %15 : vector<1x256xf32>
    %24 = arith.addf %10, %23 : vector<1x256xf32>
    %25 = tpu.iota {dimensions = array<i32: 0>} : vector<4x256xi32>
    %26 = vector.broadcast %8 : vector<1x256xi32> to vector<4x256xi32>
    %27 = arith.cmpi eq, %25, %26 : vector<4x256xi32>
    %28 = arith.extui %27 : vector<4x256xi1> to vector<4x256xi32>
    %29 = arith.sitofp %28 : vector<4x256xi32> to vector<4x256xf32>
    %c0_9 = arith.constant 0 : index
    %c0_10 = arith.constant 0 : index
    %30 = vector.load %arg6[%c0_9, %c0_10] : memref<4x1xf32, #tpu.memory_space<vmem>>, vector<4x1xf32>
    %31 = vector.broadcast %24 : vector<1x256xf32> to vector<4x256xf32>
    %32 = arith.subf %31, %6 : vector<4x256xf32>
    %33 = arith.mulf %29, %32 : vector<4x256xf32>
    %cst_11 = arith.constant dense<0.000000e+00> : vector<4xf32>
    %34 = vector.multi_reduction <add>, %33, %cst_11 [1] : vector<4x256xf32> to vector<4xf32>
    %35 = vector.shape_cast %34 : vector<4xf32> to vector<4x1xf32>
    %36 = arith.addf %30, %35 : vector<4x1xf32>
    %c0_12 = arith.constant 0 : index
    %c0_13 = arith.constant 0 : index
    %37 = vector.load %arg6[%c0_12, %c0_13] : memref<4x1xf32, #tpu.memory_space<vmem>>, vector<4x1xf32>
    tpu.vector_store %arg6[%c0_12, %c0_13], %36 {strides = array<i32>} : memref<4x1xf32, #tpu.memory_space<vmem>>, vector<4x1xf32>,
    %c0_14 = arith.constant 0 : index
    %c0_15 = arith.constant 0 : index
    %38 = vector.load %arg7[%c0_14, %c0_15] : memref<4x1xf32, #tpu.memory_space<vmem>>, vector<4x1xf32>
    %cst_16 = arith.constant dense<0.000000e+00> : vector<4xf32>
    %39 = vector.multi_reduction <add>, %29, %cst_16 [1] : vector<4x256xf32> to vector<4xf32>
    %40 = vector.shape_cast %39 : vector<4xf32> to vector<4x1xf32>
    %41 = arith.addf %38, %40 : vector<4x1xf32>
    %c0_17 = arith.constant 0 : index
    %c0_18 = arith.constant 0 : index
    %42 = vector.load %arg7[%c0_17, %c0_18] : memref<4x1xf32, #tpu.memory_space<vmem>>, vector<4x1xf32>
    tpu.vector_store %arg7[%c0_17, %c0_18], %41 {strides = array<i32>} : memref<4x1xf32, #tpu.memory_space<vmem>>, vector<4x1xf32>,
    %c0_19 = arith.constant 0 : index
    %c0_20 = arith.constant 0 : index
    %43 = vector.load %arg8[%c0_19, %c0_20] : memref<4x1xf32, #tpu.memory_space<vmem>>, vector<4x1xf32>
    %44 = arith.mulf %22, %29 : vector<4x256xf32>
    %cst_21 = arith.constant dense<0.000000e+00> : vector<4xf32>
    %45 = vector.multi_reduction <add>, %44, %cst_21 [1] : vector<4x256xf32> to vector<4xf32>
    %46 = vector.shape_cast %45 : vector<4xf32> to vector<4x1xf32>
    %47 = arith.addf %43, %46 : vector<4x1xf32>
    %c0_22 = arith.constant 0 : index
    %c0_23 = arith.constant 0 : index
    %48 = vector.load %arg8[%c0_22, %c0_23] : memref<4x1xf32, #tpu.memory_space<vmem>>, vector<4x1xf32>
    tpu.vector_store %arg8[%c0_22, %c0_23], %47 {strides = array<i32>} : memref<4x1xf32, #tpu.memory_space<vmem>>, vector<4x1xf32>,
    %c0_24 = arith.constant 0 : index
    %c0_25 = arith.constant 0 : index
    %49 = vector.load %arg9[%c0_24, %c0_25] : memref<4x1xf32, #tpu.memory_space<vmem>>, vector<4x1xf32>
    %cst_26 = arith.constant dense<0.000000e+00> : vector<4xf32>
    %50 = vector.multi_reduction <add>, %22, %cst_26 [1] : vector<4x256xf32> to vector<4xf32>
    %51 = vector.shape_cast %50 : vector<4xf32> to vector<4x1xf32>
    %52 = arith.addf %49, %51 : vector<4x1xf32>
    %c0_27 = arith.constant 0 : index
    %c0_28 = arith.constant 0 : index
    %53 = vector.load %arg9[%c0_27, %c0_28] : memref<4x1xf32, #tpu.memory_space<vmem>>, vector<4x1xf32>
    tpu.vector_store %arg9[%c0_27, %c0_28], %52 {strides = array<i32>} : memref<4x1xf32, #tpu.memory_space<vmem>>, vector<4x1xf32>,
    %c1_i32 = arith.constant 1 : i32
    %54 = arith.cmpi eq, %arg0, %c1_i32 : i32
    %c0_i32_29 = arith.constant 0 : i32
    %55 = arith.cmpi eq, %arg1, %c0_i32_29 : i32
    %56 = arith.andi %54, %55 : i1
    %57 = arith.extui %56 : i1 to i32
    %c0_i32_30 = arith.constant 0 : i32
    %58 = arith.cmpi ne, %57, %c0_i32_30 : i32
    scf.if %58 {
      %c0_31 = arith.constant 0 : index
      %c0_32 = arith.constant 0 : index
      %59 = vector.load %arg4[%c0_31, %c0_32] : memref<4x1xf32, #tpu.memory_space<vmem>>, vector<4x1xf32>
      %c0_33 = arith.constant 0 : index
      %c0_34 = arith.constant 0 : index
      %60 = vector.load %arg6[%c0_33, %c0_34] : memref<4x1xf32, #tpu.memory_space<vmem>>, vector<4x1xf32>
      %c0_35 = arith.constant 0 : index
      %c0_36 = arith.constant 0 : index
      %61 = vector.load %arg7[%c0_35, %c0_36] : memref<4x1xf32, #tpu.memory_space<vmem>>, vector<4x1xf32>
      %c0_37 = arith.constant 0 : index
      %c0_38 = arith.constant 0 : index
      %62 = vector.load %arg8[%c0_37, %c0_38] : memref<4x1xf32, #tpu.memory_space<vmem>>, vector<4x1xf32>
      %c0_39 = arith.constant 0 : index
      %c0_40 = arith.constant 0 : index
      %63 = vector.load %arg9[%c0_39, %c0_40] : memref<4x1xf32, #tpu.memory_space<vmem>>, vector<4x1xf32>
      %64 = arith.mulf %59, %60 : vector<4x1xf32>
      %65 = vector.shape_cast %64 : vector<4x1xf32> to vector<1x4x1xf32>
      %cst_41 = arith.constant dense<0.000000e+00> : vector<1xf32>
      %66 = vector.multi_reduction <add>, %65, %cst_41 [1, 2] : vector<1x4x1xf32> to vector<1xf32>
      %67 = vector.shape_cast %66 : vector<1xf32> to vector<1x1x1xf32>
      %68 = vector.extract %67[0, 0, 0] : f32 from vector<1x1x1xf32>
      %69 = vector.broadcast %68 : f32 to vector<1x1xf32>
      %70 = arith.mulf %59, %61 : vector<4x1xf32>
      %71 = vector.shape_cast %70 : vector<4x1xf32> to vector<1x4x1xf32>
      %cst_42 = arith.constant dense<0.000000e+00> : vector<1xf32>
      %72 = vector.multi_reduction <add>, %71, %cst_42 [1, 2] : vector<1x4x1xf32> to vector<1xf32>
      %73 = vector.shape_cast %72 : vector<1xf32> to vector<1x1x1xf32>
      %74 = vector.extract %73[0, 0, 0] : f32 from vector<1x1x1xf32>
      %75 = vector.broadcast %74 : f32 to vector<1x1xf32>
      %76 = arith.divf %69, %75 : vector<1x1xf32>
      %77 = arith.mulf %61, %61 : vector<4x1xf32>
      %cst_43 = arith.constant 9.99999997E-7 : f32
      %78 = vector.broadcast %cst_43 : f32 to vector<4x1xf32>
      %79 = arith.maximumf %77, %78 : vector<4x1xf32>
      %cst_44 = arith.constant 1.000000e+00 : f32
      %80 = vector.broadcast %cst_44 : f32 to vector<4x1xf32>
      %81 = arith.divf %80, %79 : vector<4x1xf32>
      %82 = arith.mulf %81, %62 : vector<4x1xf32>
      %83 = vector.shape_cast %82 : vector<4x1xf32> to vector<1x4x1xf32>
      %cst_45 = arith.constant dense<0.000000e+00> : vector<1xf32>
      %84 = vector.multi_reduction <add>, %83, %cst_45 [1, 2] : vector<1x4x1xf32> to vector<1xf32>
      %85 = vector.shape_cast %84 : vector<1xf32> to vector<1x1x1xf32>
      %86 = vector.extract %85[0, 0, 0] : f32 from vector<1x1x1xf32>
      %87 = vector.broadcast %86 : f32 to vector<1x1xf32>
      %cst_46 = arith.constant 2.000000e+00 : f32
      %88 = vector.broadcast %cst_46 : f32 to vector<1x1xf32>
      %89 = arith.mulf %88, %87 : vector<1x1xf32>
      %90 = arith.addf %61, %63 : vector<4x1xf32>
      %91 = arith.mulf %81, %90 : vector<4x1xf32>
      %92 = vector.shape_cast %91 : vector<4x1xf32> to vector<1x4x1xf32>
      %cst_47 = arith.constant dense<0.000000e+00> : vector<1xf32>
      %93 = vector.multi_reduction <add>, %92, %cst_47 [1, 2] : vector<1x4x1xf32> to vector<1xf32>
      %94 = vector.shape_cast %93 : vector<1xf32> to vector<1x1x1xf32>
      %95 = vector.extract %94[0, 0, 0] : f32 from vector<1x1x1xf32>
      %96 = vector.broadcast %95 : f32 to vector<1x1xf32>
      %cst_48 = arith.constant 9.99999997E-7 : f32
      %97 = vector.broadcast %cst_48 : f32 to vector<1x1xf32>
      %98 = arith.maximumf %96, %97 : vector<1x1xf32>
      %99 = arith.divf %89, %98 : vector<1x1xf32>
      %cst_49 = arith.constant 1.000000e+00 : f32
      %100 = vector.broadcast %cst_49 : f32 to vector<1x1xf32>
      %101 = arith.subf %100, %99 : vector<1x1xf32>
      %102 = arith.addf %76, %101 : vector<1x1xf32>
      %c0_50 = arith.constant 0 : index
      %c0_51 = arith.constant 0 : index
      %103 = vector.load %arg5[%c0_50, %c0_51] : memref<1x1xf32, #tpu.memory_space<vmem>>, vector<1x1xf32>
      tpu.vector_store %arg5[%c0_50, %c0_51], %102 {strides = array<i32>} : memref<1x1xf32, #tpu.memory_space<vmem>>, vector<1x1xf32>,
    } else {
    }
    return
  }
  func.func @transform_0(%arg0: i32, %arg1: i32) -> (i32, i32, i32) {
    %c0_i32 = arith.constant 0 : i32
    %c0_i32_0 = arith.constant 0 : i32
    return %arg0, %c0_i32, %arg1 : i32, i32, i32
  }
  func.func @transform_1(%arg0: i32, %arg1: i32) -> (i32, i32, i32) {
    %c0_i32 = arith.constant 0 : i32
    %c0_i32_0 = arith.constant 0 : i32
    return %arg0, %c0_i32, %arg1 : i32, i32, i32
  }
  func.func @transform_2(%arg0: i32, %arg1: i32) -> (i32, i32) {
    %c0_i32 = arith.constant 0 : i32
    %c0_i32_0 = arith.constant 0 : i32
    %c0_i32_1 = arith.constant 0 : i32
    return %c0_i32, %c0_i32_0 : i32, i32
  }
  func.func @transform_3(%arg0: i32, %arg1: i32) -> (i32, i32) {
    %c0_i32 = arith.constant 0 : i32
    %c0_i32_0 = arith.constant 0 : i32
    %c0_i32_1 = arith.constant 0 : i32
    return %c0_i32, %c0_i32_0 : i32, i32
  }
}

</mosaic_0001>

<llo_original>
// kernel: tpu_custom_call.1
$region0: #{tpu_custom_call.1}
  #allocation0 [shape = 'u32[]', space=smem, size = 0x4, offset = 0x4, fixed_abs, tag = 'smem constant byte address 0x4 - core index']
  #allocation1 [shape = 'u32[144,128]{1,0:T(1,128)}', space=vmem, size = 0x12000, scoped, tag = 'internal scratch']
  #allocation2 [shape = 'f32[4,1]{1,0:T(4,128)}', space=vmem, size = 0x800, scoped, tag = 'scratch operand']
  #allocation3 [shape = 'f32[4,1]{1,0:T(4,128)}', space=vmem, size = 0x800, scoped, tag = 'scratch operand']
  #allocation4 [shape = 'f32[4,1]{1,0:T(4,128)}', space=vmem, size = 0x800, scoped, tag = 'scratch operand']
  #allocation5 [shape = 'f32[4,1]{1,0:T(4,128)}', space=vmem, size = 0x800, scoped, tag = 'scratch operand']
  %s0 = inlined_call_operand.hbm [shape: f32[2,4,256], index: 0, kind: input, shape index: {}]
  %s1 = inlined_call_operand.vmem [shape: s32[2,1,256], index: 1, kind: input, shape index: {}]
  %s2 = inlined_call_operand.vmem [shape: f32[4,1], index: 2, kind: input, shape index: {}]
  %s3 = inlined_call_operand.hbm [shape: f32[1,1], index: 3, kind: output, shape index: {}]
  %s4 = sld [smem:[#allocation0]]
  $region57: #{tpu_custom_call.1} parent=0
    _
  %s6 = ssub.s32 1, %s4
  %s7 = scalar_select 0, %s6, %s4
  $region1: #{tpu_custom_call.1} parent=0
    #allocation6 [shape = 'u8[8192]{0}', space=vmem, size = 0x2000, scoped, tag = 'input window, operand 0']
    #allocation7 [shape = 's32[2]{0}', space=sflag, size = 0x8, scoped, tag = 'scoped memory for tpu_custom_call.1']
    #allocation8 [shape = 's32[2]{0}', space=sflag, size = 0x8, scoped, tag = 'scoped memory for tpu_custom_call.1']
    #allocation9 [shape = 'u8[512]{0}', space=vmem, size = 0x400, scoped, tag = 'output window, operand 0, single buffered']
    %8 = vsyncpa [#allocation7], 0
    %s9 = scalar_lea.sflag [#allocation7], 1
    %10 = vsyncpa %s9, 0
    %11 = vsyncpa [#allocation8], 0
    loop: start=0, step=1, limit=4
    $region2: #{tpu_custom_call.1} parent=1 // loop_pre_header
      _
    $region3: #{tpu_custom_call.1} parent=1 // loop_header
      %s13 = sphi 0, %s17
      %p14 = scmp.ge.s32.totalorder %s13, 4
      %s20 = sphi 0, %s32
      %s21 = sphi 0, %s28
      %s22 = sphi 0, %s20
      %s23 = sphi 0, %s21
      %s24 = sphi 0, %s22
      %s25 = sphi 0, %s23
      %s37 = sphi 0, %s39
      %s40 = sphi 0, %s37
      %s41 = sphi 0, %s40
      %s57 = sphi 0, %s41
      %s65 = sphi 0, %s67
      %s68 = sphi 0, %s65
      %s69 = sphi 0, %s68
      %s85 = sphi 0, %s69
      %s89 = sphi 0, %s89
      %s91 = sphi 0, %s89
      %s92 = sphi 0, %s91
      %s106 = sphi 0, %s92
      %s110 = sphi 0, %s110
      %s112 = sphi 0, %s110
      %s113 = sphi 0, %s112
      %s127 = sphi 0, %s113
    $region4: #{tpu_custom_call.1} parent=1 // loop_header_branch
      %16 = sbr.rel (%p14) target = $region8
    $region5: #{tpu_custom_call.1} parent=1 // loop_body
      %s18 = ssub.s32 %s13, 1
      %s19 = ssub.s32 %s13, 2
      %s26 = sadd.s32 1, %s21
      %p27 = scmp.ge.s32.totalorder %s26, 1
      %s28 = scalar_select %p27, 0, %s26
      %s29 = sadd.s32 1, %s20
      %s30 = scalar_select %p27, %s29, %s20
      %p31 = scmp.ge.s32.totalorder %s30, 2
      %s32 = scalar_select %p31, 0, %s30
      %s33 = ssub.s32 %s20, %s32
      %s34 = ssub.s32 %s21, %s28
      %s35 = sor.u32 %s33, %s34
      %p36 = scmp.eq.s32.totalorder %s35, 0
      %s38 = sadd.s32 %s37, 1
      %s39 = scalar_select %p36, %s37, %s38
      %p42 = pneg %p36
      %p43 = scmp.eq.s32.totalorder %s13, 1
      %p44 = por %p42, %p43
      %p45 = scmp.ne.s32.totalorder %s37, %s40
      %p46 = scmp.eq.s32.totalorder %s13, 0
      %p47 = por %p45, %p46
      %p48 = scmp.ne.s32.totalorder %s37, %s40
      %p49 = scmp.eq.s32.totalorder %s18, 1
      %p50 = por %p48, %p49
      %p51 = scmp.ne.s32.totalorder %s40, %s41
      %p52 = scmp.eq.s32.totalorder %s18, 0
      %p53 = por %p51, %p52
      %p54 = scmp.ne.s32.totalorder %s40, %s41
      %p55 = scmp.eq.s32.totalorder %s19, 1
      %p56 = por %p54, %p55
      %p58 = scmp.ne.s32.totalorder %s41, %s57
      %p59 = scmp.eq.s32.totalorder %s19, 0
      %p60 = por %p58, %p59
      %s61 = ssub.s32 %s20, %s32
      %s62 = ssub.s32 %s21, %s28
      %s63 = sor.u32 %s61, %s62
      %p64 = scmp.eq.s32.totalorder %s63, 0
      %s66 = sadd.s32 %s65, 1
      %s67 = scalar_select %p64, %s65, %s66
      %p70 = pneg %p64
      %p71 = scmp.eq.s32.totalorder %s13, 1
      %p72 = por %p70, %p71
      %p73 = scmp.ne.s32.totalorder %s65, %s68
      %p74 = scmp.eq.s32.totalorder %s13, 0
      %p75 = por %p73, %p74
      %p76 = scmp.ne.s32.totalorder %s65, %s68
      %p77 = scmp.eq.s32.totalorder %s18, 1
      %p78 = por %p76, %p77
      %p79 = scmp.ne.s32.totalorder %s68, %s69
      %p80 = scmp.eq.s32.totalorder %s18, 0
      %p81 = por %p79, %p80
      %p82 = scmp.ne.s32.totalorder %s68, %s69
      %p83 = scmp.eq.s32.totalorder %s19, 1
      %p84 = por %p82, %p83
      %p86 = scmp.ne.s32.totalorder %s69, %s85
      %p87 = scmp.eq.s32.totalorder %s19, 0
      %p88 = por %p86, %p87
      %s90 = sadd.s32 %s89, 1
      %p93 = scmp.eq.s32.totalorder %s13, 1
      %p94 = scmp.ne.s32.totalorder %s89, %s91
      %p95 = scmp.eq.s32.totalorder %s13, 0
      %p96 = por %p94, %p95
      %p97 = scmp.ne.s32.totalorder %s89, %s91
      %p98 = scmp.eq.s32.totalorder %s18, 1
      %p99 = por %p97, %p98
      %p100 = scmp.ne.s32.totalorder %s91, %s92
      %p101 = scmp.eq.s32.totalorder %s18, 0
      %p102 = por %p100, %p101
      %p103 = scmp.ne.s32.totalorder %s91, %s92
      %p104 = scmp.eq.s32.totalorder %s19, 1
      %p105 = por %p103, %p104
      %p107 = scmp.ne.s32.totalorder %s92, %s106
      %p108 = scmp.eq.s32.totalorder %s19, 0
      %p109 = por %p107, %p108
      %s111 = sadd.s32 %s110, 1
      %p114 = scmp.eq.s32.totalorder %s13, 1
      %p115 = scmp.ne.s32.totalorder %s110, %s112
      %p116 = scmp.eq.s32.totalorder %s13, 0
      %p117 = por %p115, %p116
      %p118 = scmp.ne.s32.totalorder %s110, %s112
      %p119 = scmp.eq.s32.totalorder %s18, 1
      %p120 = por %p118, %p119
      %p121 = scmp.ne.s32.totalorder %s112, %s113
      %p122 = scmp.eq.s32.totalorder %s18, 0
      %p123 = por %p121, %p122
      %p124 = scmp.ne.s32.totalorder %s112, %s113
      %p125 = scmp.eq.s32.totalorder %s19, 1
      %p126 = por %p124, %p125
      %p128 = scmp.ne.s32.totalorder %s113, %s127
      %p129 = scmp.eq.s32.totalorder %s19, 0
      %p130 = por %p128, %p129
      %p131 = scmp.le.s32.totalorder 1, %s13
      %p132 = scmp.lt.s32.totalorder %s13, 3
      %p133 = pnand %p131, %p132
      %p134 = pneg %p133
      // Predicated region
      $region9: #{tpu_custom_call.1} parent=5 // pred_check
        _
      $region10: #{tpu_custom_call.1} parent=5 // pred_check_branch
        %136 = sbr.rel (%p133) target = $region12
      $region11: #{tpu_custom_call.1} parent=5 // pred_region
        %s137 = ssub.s32 %s13, 1
        // Predicated region
        $region13: #{tpu_custom_call.1} parent=11 // pred_check
          %p138 = pneg %p102
        $region14: #{tpu_custom_call.1} parent=11 // pred_check_branch
          %140 = sbr.rel (%p138) target = $region16
        $region15: #{tpu_custom_call.1} parent=11 // pred_region
          _
        $region16: #{tpu_custom_call.1} parent=11 // pred_fallthru
          _
      $region12: #{tpu_custom_call.1} parent=5 // pred_fallthru
        _
      %p141 = scmp.lt.s32.totalorder %s13, 2
      // Predicated region
      $region17: #{tpu_custom_call.1} parent=5 // pred_check
        %p142 = pneg %p141
      $region18: #{tpu_custom_call.1} parent=5 // pred_check_branch
        %144 = sbr.rel (%p142) target = $region20
      $region19: #{tpu_custom_call.1} parent=5 // pred_region
        // Predicated region
        $region21: #{tpu_custom_call.1} parent=19 // pred_check
          %p145 = pneg %p47
        $region22: #{tpu_custom_call.1} parent=19 // pred_check_branch
          %147 = sbr.rel (%p145) target = $region24
        $region23: #{tpu_custom_call.1} parent=19 // pred_region
          %s148 = sand.u32 %s37, 1
          %s149 = scalar_lea.sflag [#allocation7], %s148
          %s150 = sand.u32 %s37, 1
          %s151 = smul.addr %s150, 8
          %s152 = scalar_lea.vmem [#allocation6], %s151
          %s153 = smul.u32 2, %s21
          %s155 = ssub.s32 128, 128
          %156 = vsyncadd %s149, %s155
          %s157 = smul.addr %s20, 2
          %s158 = sadd.s32 %s153, %s157
          %s159 = smul.addr %s158, 64
          %s160 = scalar_lea.hbm %s0, %s159
          %s162 = sshll.u32 %s152, 4
          %s163 = int_to_ptr.vmem [resolvable:$true] %s162
          %165 = dma.hbm_to_vmem [thread:$0]  %s160, 128, %s163, %s149
        $region24: #{tpu_custom_call.1} parent=19 // pred_fallthru
          _
        // Predicated region
        $region25: #{tpu_custom_call.1} parent=19 // pred_check
          %p166 = pneg %p75
        $region26: #{tpu_custom_call.1} parent=19 // pred_check_branch
          %168 = sbr.rel (%p166) target = $region28
        $region27: #{tpu_custom_call.1} parent=19 // pred_region
          %s169 = smul.u32 2, %s21
          %p170 = scmp.lt.s32.totalorder %s20, 1
          %s171 = scalar_select %p170, %s20, 1
          %p172 = scmp.lt.s32.totalorder %s169, 1
          %s173 = scalar_select %p172, %s169, 1
          %s174 = smul.addr %s171, 2
          %s175 = sadd.s32 %s173, %s174
          %s176 = scalar_lea.vmem %s1, %s175
          %s177 = smul.u32 2, %s21
        $region28: #{tpu_custom_call.1} parent=19 // pred_fallthru
          _
      $region20: #{tpu_custom_call.1} parent=5 // pred_fallthru
        _
      %p178 = scmp.le.s32.totalorder 1, %s13
      %p179 = scmp.lt.s32.totalorder %s13, 3
      %p180 = pnand %p178, %p179
      %p181 = pneg %p180
      // Predicated region
      $region29: #{tpu_custom_call.1} parent=5 // pred_check
        _
      $region30: #{tpu_custom_call.1} parent=5 // pred_check_branch
        %183 = sbr.rel (%p180) target = $region32
      $region31: #{tpu_custom_call.1} parent=5 // pred_region
        %s184 = ssub.s32 %s13, 1
        %s185 = sand.u32 %s40, 1
        %s186 = scalar_lea.sflag [#allocation7], %s185
        %s187 = sand.u32 %s40, 1
        %s188 = smul.addr %s187, 8
        %s189 = scalar_lea.vmem [#allocation6], %s188
        // Predicated region
        $region33: #{tpu_custom_call.1} parent=31 // pred_check
          %p190 = pneg %p53
        $region34: #{tpu_custom_call.1} parent=31 // pred_check_branch
          %192 = sbr.rel (%p190) target = $region36
        $region35: #{tpu_custom_call.1} parent=31 // pred_region
          %193 = dma.done %s186, 128
        $region36: #{tpu_custom_call.1} parent=31 // pred_fallthru
          _
        %s194 = sand.u32 %s40, 1
        %s195 = scalar_lea.sflag [#allocation7], %s194
        %s196 = sand.u32 %s40, 1
        %s197 = smul.addr %s196, 8
        %s198 = scalar_lea.vmem [#allocation6], %s197
        %p199 = pneg %p53
        %p200 = pneg %p50
        %s201 = smul.u32 2, %s23
        %p202 = scmp.lt.s32.totalorder %s22, 1
        %s203 = scalar_select %p202, %s22, 1
        %p204 = scmp.lt.s32.totalorder %s201, 1
        %s205 = scalar_select %p204, %s201, 1
        %s206 = smul.addr %s203, 2
        %s207 = sadd.s32 %s205, %s206
        %s208 = scalar_lea.vmem %s1, %s207
        %p209 = pneg %p81
        %p210 = pneg %p78
        %p211 = pneg %p102
        %p212 = pneg %p99
        %p213 = pneg %p123
        %p214 = pneg %p120
        %s215 = smul.u32 2, %s23
        %s216 = smul.u32 2, %s23
        %p217 = scmp.lt.s32.totalorder %s22, 1
        %s218 = scalar_select %p217, %s22, 1
        %p219 = scmp.lt.s32.totalorder %s216, 1
        %s220 = scalar_select %p219, %s216, 1
        %s221 = smul.addr %s218, 2
        %s222 = sadd.s32 %s220, %s221
        %s223 = scalar_lea.vmem %s1, %s222
        %s224 = smul.u32 2, %s23
        %p225 = scmp.eq.s32.totalorder %s22, 0
        %p226 = scmp.eq.s32.totalorder %s23, 0
        %p227 = pnand %p225, %p226
        %p228 = pneg %p227
        // Predicated region
        $region37: #{tpu_custom_call.1} parent=31 // pred_check
          _
        $region38: #{tpu_custom_call.1} parent=31 // pred_check_branch
          %230 = sbr.rel (%p227) target = $region40
        $region39: #{tpu_custom_call.1} parent=31 // pred_region
          %vm231 = vcmask 3072
          %232 = vst.msk [vmem:[#allocation2] sm:$0xf] %vm231, 0.0
          %233 = vst.msk [vmem:[#allocation3] sm:$0xf] %vm231, 0.0
          %234 = vst.msk [vmem:[#allocation4] sm:$0xf] %vm231, 0.0
          %235 = vst.msk [vmem:[#allocation5] sm:$0xf] %vm231, 0.0
        $region40: #{tpu_custom_call.1} parent=31 // pred_fallthru
          _
        %v236 = vld [vmem:[%s189] sm:$0xff]
        %v237 = vld [vmem:[%s223] sm:$0x3]
        %v239 = vcombine.high %v236, %v236
        %vm241 = vcmask 1043456
        %v242 = vsel %vm241, %v236, -inf
        %v243 = vrot.slane %v242, 4
        %v244 = vmax.f32 %v242, %v243
        %v245 = vrot.slane %v244, 2
        %v246 = vmax.f32 %v244, %v245
        %v247 = vrot.slane %v246, 1
        %v248 = vmax.f32 %v246, %v247
        %v249 = vsel %vm241, %v239, -inf
        %v250 = vrot.slane %v249, 4
        %v251 = vmax.f32 %v249, %v250
        %v252 = vrot.slane %v251, 2
        %v253 = vmax.f32 %v251, %v252
        %v254 = vrot.slane %v253, 1
        %v255 = vmax.f32 %v253, %v254
        %v258 = vcombine.low %v248, %v255
        %v260 = vsub.f32 %v236, %v258
        %v261 = vmul.f32 %v260, 1.442695
        %v262 = vpow.pop %v261
        %v264 = vcombine.high %v262, %v262
        %v266 = vsel %vm241, %v262, 0.0
        %v267 = vrot.slane %v266, 4
        %v268 = vadd.f32 %v266, %v267
        %v269 = vrot.slane %v268, 2
        %v270 = vadd.f32 %v268, %v269
        %v271 = vrot.slane %v270, 1
        %v272 = vadd.f32 %v270, %v271
        %v273 = vsel %vm241, %v264, 0.0
        %v274 = vrot.slane %v273, 4
        %v275 = vadd.f32 %v273, %v274
        %v276 = vrot.slane %v275, 2
        %v277 = vadd.f32 %v275, %v276
        %v278 = vrot.slane %v277, 1
        %v279 = vadd.f32 %v277, %v278
        %v280 = vrcp.pop %v272
        %v281 = vrcp.pop %v279
        %v282 = vmul.f32 %v272, %v280
        %v283 = vmul.f32 %v279, %v281
        %v284 = vsub.f32 2.0, %v282
        %v285 = vsub.f32 2.0, %v283
        %v286 = vmul.f32 %v280, %v284
        %v287 = vmul.f32 %v281, %v285
        %v290 = vcombine.low %v286, %v287
        %v292 = vmul.f32 %v262, %v290
        %v293 = vlog2.pop %v272
        %v294 = vmul.f32 %v293, 0.6931472
        %v295 = vlog2.pop %v279
        %v296 = vmul.f32 %v295, 0.6931472
        %v297 = vadd.f32 %v248, %v294
        %v298 = vadd.f32 %v255, %v296
        %v299 = vlaneseq
        %v300 = vshrl.u32 %v299, 7
        %v301 = vlaneseq
        %v302 = vshrl.u32 %v301, 7
        %v303 = vsub.s32 0, %v302
        %v304 = vrot.slane %v237, %v303
        %v305 = vlaneseq
        %v306 = vshrl.u32 %v305, 7
        %v307 = vsub.s32 1, %v306
        %v308 = vrot.slane %v237, %v307
        %vm309 = vcmp.eq.s32.totalorder %v300, %v304
        %vm310 = vcmp.eq.s32.totalorder %v300, %v308
        %v311 = vsel %vm309, 1, 0
        %v312 = vsel %vm310, 1, 0
        %v313 = vcvt.s32.f32 %v311
        %v314 = vcvt.s32.f32 %v312
        %v315 = vld [vmem:[#allocation2] sm:$0xf]
        %v316 = vsub.f32 %v297, %v236
        %v317 = vsub.f32 %v298, %v239
        %v318 = vmul.f32 %v313, %v316
        %v319 = vmul.f32 %v314, %v317
        %v320 = vsel %vm241, %v318, 0.0
        %v321 = vsel %vm241, %v319, 0.0
        %v322 = vadd.f32 %v320, %v321
        %323 = vadd.xlane.f32.xlu0 %v322
        %v324 = vpop.xlane.xlu0 %323
        %v325 = vadd.f32 %v315, %v324
        %vm326 = vcmask 3072
        %327 = vst.msk [vmem:[#allocation2] sm:$0xf] %vm326, %v325
        %v328 = vld [vmem:[#allocation3] sm:$0xf]
        %v329 = vsel %vm241, %v313, 0.0
        %v330 = vsel %vm241, %v314, 0.0
        %v331 = vadd.f32 %v329, %v330
        %332 = vadd.xlane.f32.xlu0 %v331
        %v333 = vpop.xlane.xlu0 %332
        %v334 = vadd.f32 %v328, %v333
        %335 = vst.msk [vmem:[#allocation3] sm:$0xf] %vm326, %v334
        %v336 = vld [vmem:[#allocation4] sm:$0xf]
        %v339 = vcombine.low %v313, %v314
        %v341 = vmul.f32 %v292, %v339
        %v343 = vcombine.high %v341, %v341
        %v345 = vsel %vm241, %v341, 0.0
        %v346 = vsel %vm241, %v343, 0.0
        %v347 = vadd.f32 %v345, %v346
        %348 = vadd.xlane.f32.xlu0 %v347
        %v349 = vpop.xlane.xlu0 %348
        %v350 = vadd.f32 %v336, %v349
        %351 = vst.msk [vmem:[#allocation4] sm:$0xf] %vm326, %v350
        %v352 = vld [vmem:[#allocation5] sm:$0xf]
        %v354 = vcombine.high %v292, %v292
        %v356 = vsel %vm241, %v292, 0.0
        %v357 = vsel %vm241, %v354, 0.0
        %v358 = vadd.f32 %v356, %v357
        %359 = vadd.xlane.f32.xlu0 %v358
        %v360 = vpop.xlane.xlu0 %359
        %v361 = vadd.f32 %v352, %v360
        %362 = vst.msk [vmem:[#allocation5] sm:$0xf] %vm326, %v361
        %p363 = scmp.eq.s32.totalorder %s22, 1
        %p364 = pnand %p363, %p226
        %p365 = pneg %p364
        // Predicated region
        $region41: #{tpu_custom_call.1} parent=31 // pred_check
          _
        $region42: #{tpu_custom_call.1} parent=31 // pred_check_branch
          %367 = sbr.rel (%p364) target = $region44
        $region43: #{tpu_custom_call.1} parent=31 // pred_region
          %v368 = vld [vmem:[%s2] sm:$0xf]
          %v369 = vld [vmem:[#allocation2] sm:$0xf]
          %v370 = vld [vmem:[#allocation3] sm:$0xf]
          %v371 = vld [vmem:[#allocation4] sm:$0xf]
          %v372 = vld [vmem:[#allocation5] sm:$0xf]
          %v373 = vmul.f32 %v368, %v369
          %v374 = vsel %vm326, %v373, 0.0
          %375 = vadd.xlane.f32.xlu0 %v374
          %v376 = vpop.xlane.xlu0 %375
          %v377 = vrot.slane %v376, 4
          %v378 = vadd.f32 %v376, %v377
          %v379 = vrot.slane %v378, 2
          %v380 = vadd.f32 %v378, %v379
          %v381 = vrot.slane %v380, 1
          %v382 = vadd.f32 %v380, %v381
          %s383 = vtos %v382
          %v384 = vstv %s383
          %v385 = vmul.f32 %v368, %v370
          %v386 = vsel %vm326, %v385, 0.0
          %387 = vadd.xlane.f32.xlu0 %v386
          %v388 = vpop.xlane.xlu0 %387
          %v389 = vrot.slane %v388, 4
          %v390 = vadd.f32 %v388, %v389
          %v391 = vrot.slane %v390, 2
          %v392 = vadd.f32 %v390, %v391
          %v393 = vrot.slane %v392, 1
          %v394 = vadd.f32 %v392, %v393
          %s395 = vtos %v394
          %v396 = vstv %s395
          %v397 = vrcp.pop %v396
          %v398 = vmul.f32 %v384, %v397
          %v399 = vmul.f32 %v370, %v370
          %v400 = vmax.f32 %v399, 1e-06
          %v401 = vrcp.pop %v400
          %v402 = vmul.f32 1.0, %v401
          %v403 = vmul.f32 %v402, %v371
          %v404 = vsel %vm326, %v403, 0.0
          %405 = vadd.xlane.f32.xlu0 %v404
          %v406 = vpop.xlane.xlu0 %405
          %v407 = vrot.slane %v406, 4
          %v408 = vadd.f32 %v406, %v407
          %v409 = vrot.slane %v408, 2
          %v410 = vadd.f32 %v408, %v409
          %v411 = vrot.slane %v410, 1
          %v412 = vadd.f32 %v410, %v411
          %s413 = vtos %v412
          %v414 = vstv %s413
          %v415 = vmul.f32 %v414, 2.0
          %v416 = vadd.f32 %v370, %v372
          %v417 = vmul.f32 %v402, %v416
          %v418 = vsel %vm326, %v417, 0.0
          %419 = vadd.xlane.f32.xlu0 %v418
          %v420 = vpop.xlane.xlu0 %419
          %v421 = vrot.slane %v420, 4
          %v422 = vadd.f32 %v420, %v421
          %v423 = vrot.slane %v422, 2
          %v424 = vadd.f32 %v422, %v423
          %v425 = vrot.slane %v424, 1
          %v426 = vadd.f32 %v424, %v425
          %s427 = vtos %v426
          %v428 = vstv %s427
          %v429 = vmax.f32 %v428, 1e-06
          %v430 = vrcp.pop %v429
          %v431 = vmul.f32 %v415, %v430
          %v432 = vsub.f32 1.0, %v431
          %v433 = vadd.f32 %v398, %v432
          %vm434 = vcmask 0
          %435 = vst.msk [vmem:[#allocation9] sm:$0x1] %vm434, %v433
        $region44: #{tpu_custom_call.1} parent=31 // pred_fallthru
          _
        // Predicated region
        $region45: #{tpu_custom_call.1} parent=31 // pred_check
          %p436 = pneg %p120
        $region46: #{tpu_custom_call.1} parent=31 // pred_check_branch
          %438 = sbr.rel (%p436) target = $region48
        $region47: #{tpu_custom_call.1} parent=31 // pred_region
          %s440 = ssub.s32 16, 16
          %441 = vsyncadd [#allocation8], %s440
          %s443 = sshll.u32 [#allocation9], 4
          %s444 = int_to_ptr.vmem [resolvable:$true] %s443
          %446 = dma.vmem_to_hbm [thread:$0]  %s444, 16, %s3, [#allocation8]
        $region48: #{tpu_custom_call.1} parent=31 // pred_fallthru
          _
        // Predicated region
        $region49: #{tpu_custom_call.1} parent=31 // pred_check
          %p447 = pneg %p120
        $region50: #{tpu_custom_call.1} parent=31 // pred_check_branch
          %449 = sbr.rel (%p447) target = $region52
        $region51: #{tpu_custom_call.1} parent=31 // pred_region
          %450 = dma.done [#allocation8], 16
        $region52: #{tpu_custom_call.1} parent=31 // pred_fallthru
          _
      $region32: #{tpu_custom_call.1} parent=5 // pred_fallthru
        _
      %p451 = scmp.le.s32.totalorder 2, %s13
      // Predicated region
      $region53: #{tpu_custom_call.1} parent=5 // pred_check
        %p452 = pneg %p451
      $region54: #{tpu_custom_call.1} parent=5 // pred_check_branch
        %454 = sbr.rel (%p452) target = $region56
      $region55: #{tpu_custom_call.1} parent=5 // pred_region
        %s455 = ssub.s32 %s13, 2
      $region56: #{tpu_custom_call.1} parent=5 // pred_fallthru
        _
    $region6: #{tpu_custom_call.1} parent=1 // loop_footer
      %s17 = sadd.s32 1, %s13
    $region7: #{tpu_custom_call.1} parent=1 // loop_footer_branch
      %12 = sbr.rel target = $region3
    $region8: #{tpu_custom_call.1} parent=1 // loop_exit
      _
    %456 = vsyncpa [#allocation7], 1
    %s457 = scalar_lea.sflag [#allocation7], 1
    %458 = vsyncpa %s457, 1
    %459 = vsyncpa [#allocation8], 1
    %s460 = scalar_lea.sflag [#allocation8], 1
    %461 = vsyncpa %s460, 1

</llo_original>
